<compile_context>
chip_gen: v6e
topology: v6e:2x2x1
jax: 0.10.0
libtpu: 0.0.40
codegen_flags: <defaults>
</compile_context>

<pallas_src>
import numpy as np
import jax
import jax.numpy as jnp
from jax.experimental import pallas as pl
from jax.experimental.pallas import tpu as pltpu

NUM_CLASSES = 19
ATTENTION_SIZE = 8
STEM_OUT_CH = 32      # inception Conv2d_1a_3x3 out_channels
FEAT_B_CH = 2048      # inception fc.in_features (channels of features_b)
KKC_PAD = 128         # im2col K*K*Cin (= 36) zero-padded to one full lane width
HEAD_PAD = 128        # num_classes (19) padded to one full lane tile per head


# ----------------------------- Pallas kernel ------------------------------

def _fused_kernel(patches_ref, w_stem_ref, shift_ref, pool_ref,
                  w_fold_ref, b_head_ref, out_ref):
    # patches_ref: (1, HWo, KKC_PAD) bf16   im2col patches (zero-padded lanes)
    # w_stem_ref : (KKC_PAD, 32)     bf16   flattened conv weight, BN scale folded in
    # shift_ref  : (1, 32)           f32    folded BatchNorm shift (eval mode)
    # pool_ref   : (A*A, HWo)        bf16   adaptive-avg-pool matrix (exact in bf16 here)
    # w_fold_ref : (32, 2*HEAD_PAD)  bf16   w_proj @ [last_linear | attention] (padded)
    # b_head_ref : (1, 2*HEAD_PAD)   f32    [last_linear | attention] biases (padded)
    # out_ref    : (1, 1, HEAD_PAD)  f32    lane-dense output; wrapper slices to nc

    # Conv2d_1a_3x3 (3x3 / stride 2 / no bias) + BN(eval, scale pre-folded) + ReLU.
    stem = jnp.dot(patches_ref[0], w_stem_ref[...],
                   preferred_element_type=jnp.float32)                 # (HWo, 32)
    stem = jnp.maximum(stem + shift_ref[...], 0.0)

    # Adaptive average pool commuted before the (linear) backbone stand-in.
    pooled32 = jnp.dot(pool_ref[...], stem.astype(jnp.bfloat16),
                       preferred_element_type=jnp.float32)             # (A*A, 32)

    # Fused (projection + last_linear + attention) head: one small matmul.
    head = jnp.dot(pooled32.astype(jnp.bfloat16), w_fold_ref[...],
                   preferred_element_type=jnp.float32) + b_head_ref[...]  # (A*A, 2*128)
    logits = head[:, :HEAD_PAD]          # tile-aligned view
    att_lg = head[:, HEAD_PAD:]          # tile-aligned view

    # softmax over the spatial axis (== dim=2 of the torch (B, C, A*A) view).
    m = jnp.max(att_lg, axis=0, keepdims=True)
    e = jnp.exp(att_lg - m)
    inv = pl.reciprocal(jnp.sum(e, axis=0, keepdims=True), approx=True)
    att = e * inv

    # attention-weighted sum over spatial -> (1, HEAD_PAD); padded lanes are 0.
    out_ref[0] = jnp.sum(logits * att, axis=0, keepdims=True).astype(out_ref.dtype)


# ------------------------------- wrappers ---------------------------------

def adaptive_pool_matrix(n_in, n_out):
    """1-D matrix reproducing PyTorch AdaptiveAvgPool bin boundaries."""
    P = np.zeros((n_out, n_in), np.float32)
    for i in range(n_out):
        s = (i * n_in) // n_out
        e = -((-(i + 1) * n_in) // n_out)   # ceil((i+1)*n_in / n_out)
        P[i, s:e] = 1.0 / (e - s)
    return P


def forward(x, p):
    """Eval-mode forward (returns logits of shape (B, num_classes))."""
    B, Cin, H, W = x.shape
    K, S = 3, 2
    Ho, Wo = (H - K) // S + 1, (W - K) // S + 1
    HWo = Ho * Wo
    KKC = K * K * Cin

    # im2col in the wrapper (layout glue, zero-padded to a lane-dense 128 width).
    xt = jnp.transpose(x, (0, 2, 3, 1))                                # NHWC
    pats = []
    for kh in range(K):
        for kw in range(K):
            pats.append(xt[:, kh:kh + S * Ho:S, kw:kw + S * Wo:S, :])  # (B, Ho, Wo, Cin)
    patches = jnp.concatenate(pats, axis=-1).reshape(B, HWo, KKC)
    patches = jnp.pad(patches, ((0, 0), (0, 0), (0, KKC_PAD - KKC))).astype(jnp.bfloat16)

    Cout = p["w4"].shape[0]
    # Fold BN scale into the conv weight columns (conv has no bias):
    #   (patches @ W) * scale == patches @ (W * scale)
    w_stem = jnp.transpose(p["w4"], (2, 3, 1, 0)).reshape(KKC, Cout)   # (kh,kw,ci,co)
    w_stem = w_stem * p["bn_scale"][None, :]
    w_stem = jnp.pad(w_stem, ((0, KKC_PAD - KKC), (0, 0))).astype(jnp.bfloat16)

    A = ATTENTION_SIZE
    A2 = A * A
    # bf16 is exact here because the 16->8 pooling bins have power-of-two reciprocals.
    P2d = jnp.asarray(np.kron(adaptive_pool_matrix(Ho, A),
                              adaptive_pool_matrix(Wo, A))).astype(jnp.bfloat16)  # (A*A, HWo)

    nc = p["w_lin"].shape[1]
    # Lane-tile-aligned head: pad each of last_linear / attention to 128 columns.
    w_lin_p = jnp.pad(p["w_lin"], ((0, 0), (0, HEAD_PAD - nc)))
    w_att_p = jnp.pad(p["w_att"], ((0, 0), (0, HEAD_PAD - nc)))
    w_head = jnp.concatenate([w_lin_p, w_att_p], axis=1)               # (2048, 256)
    b_head = jnp.concatenate([jnp.pad(p["b_lin"], (0, HEAD_PAD - nc)),
                              jnp.pad(p["b_att"], (0, HEAD_PAD - nc))]).reshape(1, 2 * HEAD_PAD)
    # Fold the linear backbone stand-in into the head offline (see TODO at top).
    w_fold = (p["w_proj"].astype(jnp.float32) @ w_head).astype(jnp.bfloat16)  # (32, 256)

    out = pl.pallas_call(
        _fused_kernel,
        out_shape=jax.ShapeDtypeStruct((B, 1, HEAD_PAD), jnp.float32),
        grid=(B,),
        in_specs=[
            pl.BlockSpec((1, HWo, KKC_PAD), lambda b: (b, 0, 0)),
            pl.BlockSpec((KKC_PAD, Cout), lambda b: (0, 0)),
            pl.BlockSpec((1, Cout), lambda b: (0, 0)),
            pl.BlockSpec((A2, HWo), lambda b: (0, 0)),
            pl.BlockSpec((Cout, 2 * HEAD_PAD), lambda b: (0, 0)),
            pl.BlockSpec((1, 2 * HEAD_PAD), lambda b: (0, 0)),
        ],
        out_specs=pl.BlockSpec((1, 1, HEAD_PAD), lambda b: (b, 0, 0)),
        compiler_params=pltpu.CompilerParams(
            dimension_semantics=("parallel",)),   # B>=2 keeps both v7x TCs busy
    )(patches, w_stem, p["bn_shift"].reshape(1, -1), P2d, w_fold, b_head)
    return out[:, 0, :nc]


def init_params(key):
    ks = jax.random.split(key, 8)
    # "pretrained" 3-channel stem weight (synthetic, deterministic)
    w_rgb = 0.05 * jax.random.normal(ks[0], (STEM_OUT_CH, 3, 3, 3), jnp.float32)
    # 4th input channel is a copy of channel 0, exactly as the module's __init__ does
    w4 = jnp.concatenate([w_rgb, w_rgb[:, :1]], axis=1)               # (32, 4, 3, 3)
    gamma = 1.0 + 0.1 * jax.random.normal(ks[1], (STEM_OUT_CH,), jnp.float32)
    beta = 0.1 * jax.random.normal(ks[2], (STEM_OUT_CH,), jnp.float32)
    mean = 0.1 * jax.random.normal(ks[3], (STEM_OUT_CH,), jnp.float32)
    var = jnp.abs(1.0 + 0.1 * jax.random.normal(ks[4], (STEM_OUT_CH,), jnp.float32))
    eps = 1e-3                                                        # BasicConv2d BN eps
    bn_scale = gamma / jnp.sqrt(var + eps)
    bn_shift = beta - mean * bn_scale
    # deterministic stand-in for the untranslated InceptionV3 backbone
    w_proj = 0.05 * jax.random.normal(ks[5], (STEM_OUT_CH, FEAT_B_CH), jnp.float32)
    # head: last_linear / attention 1x1 convs (weights stored (C_in, num_classes))
    w_lin = 0.02 * jax.random.normal(ks[6], (FEAT_B_CH, NUM_CLASSES), jnp.float32)
    b_lin = 0.01 * jnp.arange(NUM_CLASSES, dtype=jnp.float32)
    w_att = 0.02 * jax.random.normal(ks[7], (FEAT_B_CH, NUM_CLASSES), jnp.float32)
    b_att = jnp.zeros((NUM_CLASSES,), jnp.float32)
    return dict(w4=w4, bn_scale=bn_scale, bn_shift=bn_shift, w_proj=w_proj,
                w_lin=w_lin, b_lin=b_lin, w_att=w_att, b_att=b_att)


# ------------------------------ reference ---------------------------------

def forward_reference(x, p):
    """Pure-JAX f32 reference for the translated compute path (project-then-pool)."""
    scale = p["bn_scale"].reshape(1, -1, 1, 1)
    shift = p["bn_shift"].reshape(1, -1, 1, 1)
    conv = jax.lax.conv_general_dilated(
        x, p["w4"], window_strides=(2, 2), padding="VALID",
        dimension_numbers=("NCHW", "OIHW", "NCHW"))
    stem = jnp.maximum(conv * scale + shift, 0.0)                     # (B, 32, Ho, Wo)
    B, C, Ho, Wo = stem.shape
    stem_flat = jnp.transpose(stem, (0, 2, 3, 1)).reshape(B, Ho * Wo, C)
    # linear stand-in for the untranslated InceptionV3 trunk (see TODO at top)
    features_b = stem_flat @ p["w_proj"]                              # (B, Ho*Wo, 2048)
    P2d = jnp.asarray(np.kron(adaptive_pool_matrix(Ho, ATTENTION_SIZE),
                              adaptive_pool_matrix(Wo, ATTENTION_SIZE)))
    pooled = jnp.einsum("os,bsc->boc", P2d, features_b)               # (B, A*A, 2048)
    logits = pooled @ p["w_lin"] + p["b_lin"]                         # (B, A*A, 19)
    att = jax.nn.softmax(pooled @ p["w_att"] + p["b_att"], axis=1)    # softmax over spatial
    return jnp.sum(logits * att, axis=1)                              # (B, 19)


if __name__ == "__main__":
    key = jax.random.PRNGKey(0)
    k_x, k_p = jax.random.split(key)
    # B=2, 4-channel input; 33x33 -> stem 16x16 -> adaptive-avg-pool 16x16 -> 8x8
    x = jax.random.normal(k_x, (2, 4, 33, 33), jnp.float32)
    params = init_params(k_p)

    out = jax.jit(forward)(x, params)
    out = jax.block_until_ready(out)
    assert out.shape == (2, NUM_CLASSES), out.shape

    ref = jax.block_until_ready(forward_reference(x, params))
    np.testing.assert_allclose(np.asarray(out), np.asarray(ref), rtol=2e-2, atol=2e-2)

    print("KERNEL_OK")
</pallas_src>

<mosaic_0001>
module attributes {stable_mosaic.version = 11 : i64} {
  func.func @_fused_kernel(%arg0: i32, %arg1: memref<1x256x128xbf16, #tpu.memory_space<vmem>>, %arg2: memref<128x32xbf16, #tpu.memory_space<vmem>>, %arg3: memref<1x32xf32, #tpu.memory_space<vmem>>, %arg4: memref<64x256xbf16, #tpu.memory_space<vmem>>, %arg5: memref<32x256xbf16, #tpu.memory_space<vmem>>, %arg6: memref<1x256xf32, #tpu.memory_space<vmem>>, %arg7: memref<1x1x128xf32, #tpu.memory_space<vmem>>) attributes {dimension_semantics = [#tpu.dimension_semantics<parallel>], iteration_bounds = array<i64: 2>, scalar_prefetch = 0 : i64, scratch_operands = 0 : i64, tpu.core_type = #tpu.core_type<tc>, window_params = [{transform_indices = @transform_0, window_bounds = array<i64: 1, 256, 128>}, {pipeline_mode = #tpu.pipeline_mode<synchronous>, transform_indices = @transform_1, window_bounds = array<i64: 128, 32>}, {pipeline_mode = #tpu.pipeline_mode<synchronous>, transform_indices = @transform_2, window_bounds = array<i64: 1, 32>}, {pipeline_mode = #tpu.pipeline_mode<synchronous>, transform_indices = @transform_3, window_bounds = array<i64: 64, 256>}, {pipeline_mode = #tpu.pipeline_mode<synchronous>, transform_indices = @transform_4, window_bounds = array<i64: 32, 256>}, {pipeline_mode = #tpu.pipeline_mode<synchronous>, transform_indices = @transform_5, window_bounds = array<i64: 1, 256>}, {transform_indices = @transform_6, window_bounds = array<i64: 1, 1, 128>}]} {
    %c0 = arith.constant 0 : index
    %c0_0 = arith.constant 0 : index
    %c0_1 = arith.constant 0 : index
    %0 = vector.load %arg1[%c0, %c0_0, %c0_1] : memref<1x256x128xbf16, #tpu.memory_space<vmem>>, vector<1x256x128xbf16>
    %1 = vector.shape_cast %0 : vector<1x256x128xbf16> to vector<256x128xbf16>
    %c0_2 = arith.constant 0 : index
    %c0_3 = arith.constant 0 : index
    %2 = vector.load %arg2[%c0_2, %c0_3] : memref<128x32xbf16, #tpu.memory_space<vmem>>, vector<128x32xbf16>
    %cst = arith.constant dense<0.000000e+00> : vector<256x32xf32>
    %3 = tpu.matmul %1, %2, %cst {dimension_numbers = #tpu.dot_dimension_numbers<[1], [0], [0], [1], [0, 0, 1, 1], [], []>} : vector<256x128xbf16>, vector<128x32xbf16>, vector<256x32xf32> -> vector<256x32xf32>
    %c0_4 = arith.constant 0 : index
    %c0_5 = arith.constant 0 : index
    %4 = vector.load %arg3[%c0_4, %c0_5] : memref<1x32xf32, #tpu.memory_space<vmem>>, vector<1x32xf32>
    %5 = vector.broadcast %4 : vector<1x32xf32> to vector<256x32xf32>
    %6 = arith.addf %3, %5 : vector<256x32xf32>
    %cst_6 = arith.constant 0.000000e+00 : f32
    %7 = vector.broadcast %cst_6 : f32 to vector<256x32xf32>
    %8 = arith.maximumf %6, %7 : vector<256x32xf32>
    %c0_7 = arith.constant 0 : index
    %c0_8 = arith.constant 0 : index
    %9 = vector.load %arg4[%c0_7, %c0_8] : memref<64x256xbf16, #tpu.memory_space<vmem>>, vector<64x256xbf16>
    %10 = arith.truncf %8 : vector<256x32xf32> to vector<256x32xbf16>
    %cst_9 = arith.constant dense<0.000000e+00> : vector<64x32xf32>
    %11 = tpu.matmul %9, %10, %cst_9 {dimension_numbers = #tpu.dot_dimension_numbers<[1], [0], [0], [1], [0, 0, 1, 1], [], []>} : vector<64x256xbf16>, vector<256x32xbf16>, vector<64x32xf32> -> vector<64x32xf32>
    %12 = arith.truncf %11 : vector<64x32xf32> to vector<64x32xbf16>
    %c0_10 = arith.constant 0 : index
    %c0_11 = arith.constant 0 : index
    %13 = vector.load %arg5[%c0_10, %c0_11] : memref<32x256xbf16, #tpu.memory_space<vmem>>, vector<32x256xbf16>
    %cst_12 = arith.constant dense<0.000000e+00> : vector<64x256xf32>
    %14 = tpu.matmul %12, %13, %cst_12 {dimension_numbers = #tpu.dot_dimension_numbers<[1], [0], [0], [1], [0, 0, 1, 1], [], []>} : vector<64x32xbf16>, vector<32x256xbf16>, vector<64x256xf32> -> vector<64x256xf32>
    %c0_13 = arith.constant 0 : index
    %c0_14 = arith.constant 0 : index
    %15 = vector.load %arg6[%c0_13, %c0_14] : memref<1x256xf32, #tpu.memory_space<vmem>>, vector<1x256xf32>
    %16 = vector.broadcast %15 : vector<1x256xf32> to vector<64x256xf32>
    %17 = arith.addf %14, %16 : vector<64x256xf32>
    %18 = vector.extract_strided_slice %17 {offsets = [0, 0], sizes = [64, 128], strides = [1, 1]} : vector<64x256xf32> to vector<64x128xf32>
    %19 = vector.extract_strided_slice %17 {offsets = [0, 128], sizes = [64, 128], strides = [1, 1]} : vector<64x256xf32> to vector<64x128xf32>
    %cst_15 = arith.constant dense<0xFF800000> : vector<128xf32>
    %20 = vector.multi_reduction <maximumf>, %19, %cst_15 [0] : vector<64x128xf32> to vector<128xf32>
    %21 = vector.shape_cast %20 : vector<128xf32> to vector<1x128xf32>
    %22 = vector.broadcast %21 : vector<1x128xf32> to vector<64x128xf32>
    %23 = arith.subf %19, %22 : vector<64x128xf32>
    %24 = math.exp %23 : vector<64x128xf32>
    %cst_16 = arith.constant dense<0.000000e+00> : vector<128xf32>
    %25 = vector.multi_reduction <add>, %24, %cst_16 [0] : vector<64x128xf32> to vector<128xf32>
    %26 = vector.shape_cast %25 : vector<128xf32> to vector<1x128xf32>
    %27 = tpu.reciprocal %26 {approx = true} : vector<1x128xf32> -> vector<1x128xf32>
    %28 = vector.broadcast %27 : vector<1x128xf32> to vector<64x128xf32>
    %29 = arith.mulf %24, %28 : vector<64x128xf32>
    %30 = arith.mulf %18, %29 : vector<64x128xf32>
    %cst_17 = arith.constant dense<0.000000e+00> : vector<128xf32>
    %31 = vector.multi_reduction <add>, %30, %cst_17 [0] : vector<64x128xf32> to vector<128xf32>
    %32 = vector.shape_cast %31 : vector<128xf32> to vector<1x128xf32>
    %c0_18 = arith.constant 0 : index
    %c0_19 = arith.constant 0 : index
    %c0_20 = arith.constant 0 : index
    %33 = vector.load %arg7[%c0_18, %c0_19, %c0_20] : memref<1x1x128xf32, #tpu.memory_space<vmem>>, vector<1x1x128xf32>
    %34 = vector.shape_cast %33 : vector<1x1x128xf32> to vector<1x128xf32>
    %35 = vector.shape_cast %32 : vector<1x128xf32> to vector<1x1x128xf32>
    tpu.vector_store %arg7[%c0_18, %c0_19, %c0_20], %35 {strides = array<i32>} : memref<1x1x128xf32, #tpu.memory_space<vmem>>, vector<1x1x128xf32>,
    return
  }
  func.func @transform_0(%arg0: i32) -> (i32, i32, i32) {
    %c0_i32 = arith.constant 0 : i32
    %c0_i32_0 = arith.constant 0 : i32
    %c0_i32_1 = arith.constant 0 : i32
    return %arg0, %c0_i32, %c0_i32_0 : i32, i32, i32
  }
  func.func @transform_1(%arg0: i32) -> (i32, i32) {
    %c0_i32 = arith.constant 0 : i32
    %c0_i32_0 = arith.constant 0 : i32
    %c0_i32_1 = arith.constant 0 : i32
    return %c0_i32, %c0_i32_0 : i32, i32
  }
  func.func @transform_2(%arg0: i32) -> (i32, i32) {
    %c0_i32 = arith.constant 0 : i32
    %c0_i32_0 = arith.constant 0 : i32
    %c0_i32_1 = arith.constant 0 : i32
    return %c0_i32, %c0_i32_0 : i32, i32
  }
  func.func @transform_3(%arg0: i32) -> (i32, i32) {
    %c0_i32 = arith.constant 0 : i32
    %c0_i32_0 = arith.constant 0 : i32
    %c0_i32_1 = arith.constant 0 : i32
    return %c0_i32, %c0_i32_0 : i32, i32
  }
  func.func @transform_4(%arg0: i32) -> (i32, i32) {
    %c0_i32 = arith.constant 0 : i32
    %c0_i32_0 = arith.constant 0 : i32
    %c0_i32_1 = arith.constant 0 : i32
    return %c0_i32, %c0_i32_0 : i32, i32
  }
  func.func @transform_5(%arg0: i32) -> (i32, i32) {
    %c0_i32 = arith.constant 0 : i32
    %c0_i32_0 = arith.constant 0 : i32
    %c0_i32_1 = arith.constant 0 : i32
    return %c0_i32, %c0_i32_0 : i32, i32
  }
  func.func @transform_6(%arg0: i32) -> (i32, i32, i32) {
    %c0_i32 = arith.constant 0 : i32
    %c0_i32_0 = arith.constant 0 : i32
    %c0_i32_1 = arith.constant 0 : i32
    return %arg0, %c0_i32, %c0_i32_0 : i32, i32, i32
  }
}

</mosaic_0001>

<llo_original>
// kernel: forward.1
$region0: #{forward.1}
  #allocation0 [shape = 'u32[]', space=smem, size = 0x4, offset = 0x4, fixed_abs, tag = 'smem constant byte address 0x4 - core index']
  #allocation1 [shape = 'u32[144,128]{1,0:T(1,128)}', space=vmem, size = 0x12000, scoped, tag = 'internal scratch']
  %s0 = inlined_call_operand.vmem [shape: bf16[2,256,128], index: 0, kind: input, shape index: {}]
  %s1 = inlined_call_operand.vmem [shape: bf16[128,32], index: 1, kind: input, shape index: {}]
  %s2 = inlined_call_operand.vmem [shape: f32[1,32], index: 2, kind: input, shape index: {}]
  %s3 = inlined_call_operand.vmem [shape: bf16[64,256], index: 3, kind: input, shape index: {}]
  %s4 = inlined_call_operand.vmem [shape: bf16[32,256], index: 4, kind: input, shape index: {}]
  %s5 = inlined_call_operand.vmem [shape: f32[1,256], index: 5, kind: input, shape index: {}]
  %s6 = inlined_call_operand.hbm [shape: f32[2,1,128], index: 6, kind: output, shape index: {}]
  %s7 = sld [smem:[#allocation0]]
  $region57: #{forward.1} parent=0
    _
  %s9 = ssub.s32 1, %s7
  %s10 = scalar_select 0, %s9, %s7
  $region1: #{forward.1} parent=0
    #allocation2 [shape = 'u8[1024]{0}', space=vmem, size = 0x400, scoped, tag = 'output window, operand 0']
    #allocation3 [shape = 's32[2]{0}', space=sflag, size = 0x8, scoped, tag = 'scoped memory for forward.1']
    %11 = vsyncpa [#allocation3], 0
    %s12 = scalar_lea.sflag [#allocation3], 1
    %13 = vsyncpa %s12, 0
    loop: start=0, step=1, limit=4
    $region2: #{forward.1} parent=1 // loop_pre_header
      _
    $region3: #{forward.1} parent=1 // loop_header
      %s15 = sphi 0, %s19
      %p16 = scmp.ge.s32.totalorder %s15, 4
      %s25 = sphi 0, %s27
      %s28 = sphi 0, %s25
      %s29 = sphi 0, %s28
      %s45 = sphi 0, %s29
      %s49 = sphi 0, %s49
      %s51 = sphi 0, %s49
      %s52 = sphi 0, %s51
      %s66 = sphi 0, %s52
      %s70 = sphi 0, %s70
      %s72 = sphi 0, %s70
      %s73 = sphi 0, %s72
      %s87 = sphi 0, %s73
      %s91 = sphi 0, %s91
      %s93 = sphi 0, %s91
      %s94 = sphi 0, %s93
      %s108 = sphi 0, %s94
      %s112 = sphi 0, %s112
      %s114 = sphi 0, %s112
      %s115 = sphi 0, %s114
      %s129 = sphi 0, %s115
      %s133 = sphi 0, %s133
      %s135 = sphi 0, %s133
      %s136 = sphi 0, %s135
      %s150 = sphi 0, %s136
      %s156 = sphi 0, %s158
      %s159 = sphi 0, %s156
      %s160 = sphi 0, %s159
      %s176 = sphi 0, %s160
    $region4: #{forward.1} parent=1 // loop_header_branch
      %18 = sbr.rel (%p16) target = $region8
    $region5: #{forward.1} parent=1 // loop_body
      %s20 = ssub.s32 %s15, 1
      %s21 = ssub.s32 %s15, 2
      %s22 = sadd.s32 %s15, 1
      %s23 = ssub.s32 %s15, %s22
      %p24 = scmp.eq.s32.totalorder %s23, 0
      %s26 = sadd.s32 %s25, 1
      %s27 = scalar_select %p24, %s25, %s26
      %p30 = pneg %p24
      %p31 = scmp.eq.s32.totalorder %s15, 1
      %p32 = por %p30, %p31
      %p33 = scmp.ne.s32.totalorder %s25, %s28
      %p34 = scmp.eq.s32.totalorder %s15, 0
      %p35 = por %p33, %p34
      %p36 = scmp.ne.s32.totalorder %s25, %s28
      %p37 = scmp.eq.s32.totalorder %s20, 1
      %p38 = por %p36, %p37
      %p39 = scmp.ne.s32.totalorder %s28, %s29
      %p40 = scmp.eq.s32.totalorder %s20, 0
      %p41 = por %p39, %p40
      %p42 = scmp.ne.s32.totalorder %s28, %s29
      %p43 = scmp.eq.s32.totalorder %s21, 1
      %p44 = por %p42, %p43
      %p46 = scmp.ne.s32.totalorder %s29, %s45
      %p47 = scmp.eq.s32.totalorder %s21, 0
      %p48 = por %p46, %p47
      %s50 = sadd.s32 %s49, 1
      %p53 = scmp.eq.s32.totalorder %s15, 1
      %p54 = scmp.ne.s32.totalorder %s49, %s51
      %p55 = scmp.eq.s32.totalorder %s15, 0
      %p56 = por %p54, %p55
      %p57 = scmp.ne.s32.totalorder %s49, %s51
      %p58 = scmp.eq.s32.totalorder %s20, 1
      %p59 = por %p57, %p58
      %p60 = scmp.ne.s32.totalorder %s51, %s52
      %p61 = scmp.eq.s32.totalorder %s20, 0
      %p62 = por %p60, %p61
      %p63 = scmp.ne.s32.totalorder %s51, %s52
      %p64 = scmp.eq.s32.totalorder %s21, 1
      %p65 = por %p63, %p64
      %p67 = scmp.ne.s32.totalorder %s52, %s66
      %p68 = scmp.eq.s32.totalorder %s21, 0
      %p69 = por %p67, %p68
      %s71 = sadd.s32 %s70, 1
      %p74 = scmp.eq.s32.totalorder %s15, 1
      %p75 = scmp.ne.s32.totalorder %s70, %s72
      %p76 = scmp.eq.s32.totalorder %s15, 0
      %p77 = por %p75, %p76
      %p78 = scmp.ne.s32.totalorder %s70, %s72
      %p79 = scmp.eq.s32.totalorder %s20, 1
      %p80 = por %p78, %p79
      %p81 = scmp.ne.s32.totalorder %s72, %s73
      %p82 = scmp.eq.s32.totalorder %s20, 0
      %p83 = por %p81, %p82
      %p84 = scmp.ne.s32.totalorder %s72, %s73
      %p85 = scmp.eq.s32.totalorder %s21, 1
      %p86 = por %p84, %p85
      %p88 = scmp.ne.s32.totalorder %s73, %s87
      %p89 = scmp.eq.s32.totalorder %s21, 0
      %p90 = por %p88, %p89
      %s92 = sadd.s32 %s91, 1
      %p95 = scmp.eq.s32.totalorder %s15, 1
      %p96 = scmp.ne.s32.totalorder %s91, %s93
      %p97 = scmp.eq.s32.totalorder %s15, 0
      %p98 = por %p96, %p97
      %p99 = scmp.ne.s32.totalorder %s91, %s93
      %p100 = scmp.eq.s32.totalorder %s20, 1
      %p101 = por %p99, %p100
      %p102 = scmp.ne.s32.totalorder %s93, %s94
      %p103 = scmp.eq.s32.totalorder %s20, 0
      %p104 = por %p102, %p103
      %p105 = scmp.ne.s32.totalorder %s93, %s94
      %p106 = scmp.eq.s32.totalorder %s21, 1
      %p107 = por %p105, %p106
      %p109 = scmp.ne.s32.totalorder %s94, %s108
      %p110 = scmp.eq.s32.totalorder %s21, 0
      %p111 = por %p109, %p110
      %s113 = sadd.s32 %s112, 1
      %p116 = scmp.eq.s32.totalorder %s15, 1
      %p117 = scmp.ne.s32.totalorder %s112, %s114
      %p118 = scmp.eq.s32.totalorder %s15, 0
      %p119 = por %p117, %p118
      %p120 = scmp.ne.s32.totalorder %s112, %s114
      %p121 = scmp.eq.s32.totalorder %s20, 1
      %p122 = por %p120, %p121
      %p123 = scmp.ne.s32.totalorder %s114, %s115
      %p124 = scmp.eq.s32.totalorder %s20, 0
      %p125 = por %p123, %p124
      %p126 = scmp.ne.s32.totalorder %s114, %s115
      %p127 = scmp.eq.s32.totalorder %s21, 1
      %p128 = por %p126, %p127
      %p130 = scmp.ne.s32.totalorder %s115, %s129
      %p131 = scmp.eq.s32.totalorder %s21, 0
      %p132 = por %p130, %p131
      %s134 = sadd.s32 %s133, 1
      %p137 = scmp.eq.s32.totalorder %s15, 1
      %p138 = scmp.ne.s32.totalorder %s133, %s135
      %p139 = scmp.eq.s32.totalorder %s15, 0
      %p140 = por %p138, %p139
      %p141 = scmp.ne.s32.totalorder %s133, %s135
      %p142 = scmp.eq.s32.totalorder %s20, 1
      %p143 = por %p141, %p142
      %p144 = scmp.ne.s32.totalorder %s135, %s136
      %p145 = scmp.eq.s32.totalorder %s20, 0
      %p146 = por %p144, %p145
      %p147 = scmp.ne.s32.totalorder %s135, %s136
      %p148 = scmp.eq.s32.totalorder %s21, 1
      %p149 = por %p147, %p148
      %p151 = scmp.ne.s32.totalorder %s136, %s150
      %p152 = scmp.eq.s32.totalorder %s21, 0
      %p153 = por %p151, %p152
      %s154 = ssub.s32 %s15, %s22
      %p155 = scmp.eq.s32.totalorder %s154, 0
      %s157 = sadd.s32 %s156, 1
      %s158 = scalar_select %p155, %s156, %s157
      %p161 = pneg %p155
      %p162 = scmp.eq.s32.totalorder %s15, 1
      %p163 = por %p161, %p162
      %p164 = scmp.ne.s32.totalorder %s156, %s159
      %p165 = scmp.eq.s32.totalorder %s15, 0
      %p166 = por %p164, %p165
      %p167 = scmp.ne.s32.totalorder %s156, %s159
      %p168 = scmp.eq.s32.totalorder %s20, 1
      %p169 = por %p167, %p168
      %p170 = scmp.ne.s32.totalorder %s159, %s160
      %p171 = scmp.eq.s32.totalorder %s20, 0
      %p172 = por %p170, %p171
      %p173 = scmp.ne.s32.totalorder %s159, %s160
      %p174 = scmp.eq.s32.totalorder %s21, 1
      %p175 = por %p173, %p174
      %p177 = scmp.ne.s32.totalorder %s160, %s176
      %p178 = scmp.eq.s32.totalorder %s21, 0
      %p179 = por %p177, %p178
      %p180 = scmp.le.s32.totalorder 1, %s15
      %p181 = scmp.lt.s32.totalorder %s15, 3
      %p182 = pnand %p180, %p181
      %p183 = pneg %p182
      // Predicated region
      $region9: #{forward.1} parent=5 // pred_check
        _
      $region10: #{forward.1} parent=5 // pred_check_branch
        %185 = sbr.rel (%p182) target = $region12
      $region11: #{forward.1} parent=5 // pred_region
        %s186 = ssub.s32 %s15, 1
        // Predicated region
        $region13: #{forward.1} parent=11 // pred_check
          %p187 = pneg %p62
        $region14: #{forward.1} parent=11 // pred_check_branch
          %189 = sbr.rel (%p187) target = $region16
        $region15: #{forward.1} parent=11 // pred_region
          _
        $region16: #{forward.1} parent=11 // pred_fallthru
          _
        // Predicated region
        $region17: #{forward.1} parent=11 // pred_check
          %p190 = pneg %p83
        $region18: #{forward.1} parent=11 // pred_check_branch
          %192 = sbr.rel (%p190) target = $region20
        $region19: #{forward.1} parent=11 // pred_region
          _
        $region20: #{forward.1} parent=11 // pred_fallthru
          _
        // Predicated region
        $region21: #{forward.1} parent=11 // pred_check
          %p193 = pneg %p104
        $region22: #{forward.1} parent=11 // pred_check_branch
          %195 = sbr.rel (%p193) target = $region24
        $region23: #{forward.1} parent=11 // pred_region
          _
        $region24: #{forward.1} parent=11 // pred_fallthru
          _
        // Predicated region
        $region25: #{forward.1} parent=11 // pred_check
          %p196 = pneg %p125
        $region26: #{forward.1} parent=11 // pred_check_branch
          %198 = sbr.rel (%p196) target = $region28
        $region27: #{forward.1} parent=11 // pred_region
          _
        $region28: #{forward.1} parent=11 // pred_fallthru
          _
        // Predicated region
        $region29: #{forward.1} parent=11 // pred_check
          %p199 = pneg %p146
        $region30: #{forward.1} parent=11 // pred_check_branch
          %201 = sbr.rel (%p199) target = $region32
        $region31: #{forward.1} parent=11 // pred_region
          _
        $region32: #{forward.1} parent=11 // pred_fallthru
          _
      $region12: #{forward.1} parent=5 // pred_fallthru
        _
      %p202 = scmp.lt.s32.totalorder %s15, 2
      // Predicated region
      $region33: #{forward.1} parent=5 // pred_check
        %p203 = pneg %p202
      $region34: #{forward.1} parent=5 // pred_check_branch
        %205 = sbr.rel (%p203) target = $region36
      $region35: #{forward.1} parent=5 // pred_region
        // Predicated region
        $region37: #{forward.1} parent=35 // pred_check
          %p206 = pneg %p35
        $region38: #{forward.1} parent=35 // pred_check_branch
          %208 = sbr.rel (%p206) target = $region40
        $region39: #{forward.1} parent=35 // pred_region
          %p209 = scmp.lt.s32.totalorder %s15, 1
          %s210 = scalar_select %p209, %s15, 1
          %s211 = smul.addr %s210, 32
          %s212 = smul.addr %s211, 4
          %s213 = scalar_lea.vmem %s0, %s212
        $region40: #{forward.1} parent=35 // pred_fallthru
          _
      $region36: #{forward.1} parent=5 // pred_fallthru
        _
      %p214 = scmp.le.s32.totalorder 1, %s15
      %p215 = scmp.lt.s32.totalorder %s15, 3
      %p216 = pnand %p214, %p215
      %p217 = pneg %p216
      // Predicated region
      $region41: #{forward.1} parent=5 // pred_check
        _
      $region42: #{forward.1} parent=5 // pred_check_branch
        %219 = sbr.rel (%p216) target = $region44
      $region43: #{forward.1} parent=5 // pred_region
        %s220 = ssub.s32 %s15, 1
        %p221 = scmp.lt.s32.totalorder %s20, 1
        %s222 = scalar_select %p221, %s20, 1
        %s223 = smul.addr %s222, 32
        %s224 = smul.addr %s223, 4
        %s225 = scalar_lea.vmem %s0, %s224
        %p226 = pneg %p41
        %p227 = pneg %p38
        %p228 = pneg %p62
        %p229 = pneg %p59
        %p230 = pneg %p83
        %p231 = pneg %p80
        %p232 = pneg %p104
        %p233 = pneg %p101
        %p234 = pneg %p125
        %p235 = pneg %p122
        %p236 = pneg %p146
        %p237 = pneg %p143
        %p238 = pneg %p172
        %p239 = pneg %p169
        %s240 = sand.u32 %s159, 1
        %s241 = scalar_lea.sflag [#allocation3], %s240
        %s242 = sand.u32 %s159, 1
        %s243 = scalar_lea.vmem [#allocation2], %s242
        %p244 = scmp.lt.s32.totalorder %s20, 1
        %s245 = scalar_select %p244, %s20, 1
        %s246 = smul.addr %s245, 32
        %s247 = smul.addr %s246, 4
        %s248 = scalar_lea.vmem %s0, %s247
        %v250 = vld [vmem:[%s248] sm:$0xf]
        %v251 = vld [vmem:[%s248 + $0x4] sm:$0xf]
        %v252 = vld [vmem:[%s248 + $0x8] sm:$0xf]
        %v253 = vld [vmem:[%s248 + $0xc] sm:$0xf]
        %v254 = vld [vmem:[%s248 + $0x10] sm:$0xf]
        %v255 = vld [vmem:[%s248 + $0x14] sm:$0xf]
        %v256 = vld [vmem:[%s248 + $0x18] sm:$0xf]
        %v257 = vld [vmem:[%s248 + $0x1c] sm:$0xf]
        %v258 = vld [vmem:[%s248 + $0x20] sm:$0xf]
        %v259 = vld [vmem:[%s248 + $0x24] sm:$0xf]
        %v260 = vld [vmem:[%s248 + $0x28] sm:$0xf]
        %v261 = vld [vmem:[%s248 + $0x2c] sm:$0xf]
        %v262 = vld [vmem:[%s248 + $0x30] sm:$0xf]
        %v263 = vld [vmem:[%s248 + $0x34] sm:$0xf]
        %v264 = vld [vmem:[%s248 + $0x38] sm:$0xf]
        %v265 = vld [vmem:[%s248 + $0x3c] sm:$0xf]
        %v266 = vld [vmem:[%s248 + $0x40] sm:$0xf]
        %v267 = vld [vmem:[%s248 + $0x44] sm:$0xf]
        %v268 = vld [vmem:[%s248 + $0x48] sm:$0xf]
        %v269 = vld [vmem:[%s248 + $0x4c] sm:$0xf]
        %v270 = vld [vmem:[%s248 + $0x50] sm:$0xf]
        %v271 = vld [vmem:[%s248 + $0x54] sm:$0xf]
        %v272 = vld [vmem:[%s248 + $0x58] sm:$0xf]
        %v273 = vld [vmem:[%s248 + $0x5c] sm:$0xf]
        %v274 = vld [vmem:[%s248 + $0x60] sm:$0xf]
        %v275 = vld [vmem:[%s248 + $0x64] sm:$0xf]
        %v276 = vld [vmem:[%s248 + $0x68] sm:$0xf]
        %v277 = vld [vmem:[%s248 + $0x6c] sm:$0xf]
        %v278 = vld [vmem:[%s248 + $0x70] sm:$0xf]
        %v279 = vld [vmem:[%s248 + $0x74] sm:$0xf]
        %v280 = vld [vmem:[%s248 + $0x78] sm:$0xf]
        %v281 = vld [vmem:[%s248 + $0x7c] sm:$0xf]
        %v282 = vld [vmem:[%s1] sm:$0xf]
        %v283 = vld [vmem:[%s1 + $0x4] sm:$0xf]
        %v284 = vld [vmem:[%s1 + $0x8] sm:$0xf]
        %v285 = vld [vmem:[%s1 + $0xc] sm:$0xf]
        %v286 = vld [vmem:[%s1 + $0x10] sm:$0xf]
        %v287 = vld [vmem:[%s1 + $0x14] sm:$0xf]
        %v288 = vld [vmem:[%s1 + $0x18] sm:$0xf]
        %v289 = vld [vmem:[%s1 + $0x1c] sm:$0xf]
        %v290 = vld [vmem:[%s1 + $0x20] sm:$0xf]
        %v291 = vld [vmem:[%s1 + $0x24] sm:$0xf]
        %v292 = vld [vmem:[%s1 + $0x28] sm:$0xf]
        %v293 = vld [vmem:[%s1 + $0x2c] sm:$0xf]
        %v294 = vld [vmem:[%s1 + $0x30] sm:$0xf]
        %v295 = vld [vmem:[%s1 + $0x34] sm:$0xf]
        %v296 = vld [vmem:[%s1 + $0x38] sm:$0xf]
        %v297 = vld [vmem:[%s1 + $0x3c] sm:$0xf]
        %v298 = vld [vmem:[%s2] sm:$0x1]
        %v300 = vlaneseq
        %v301 = vshrl.u32 %v300, 7
        %v302 = vsub.s32 0, %v301
        %v303 = vrot.slane %v298, %v302
        %v337 = vunpack.c.l.b16 %v250
        %v338 = vunpack.c.l.b16 %v251
        %v339 = vunpack.c.l.b16 %v252
        %v340 = vunpack.c.l.b16 %v253
        %v341 = vunpack.c.l.b16 %v254
        %v342 = vunpack.c.l.b16 %v255
        %v343 = vunpack.c.l.b16 %v256
        %v344 = vunpack.c.l.b16 %v257
        %v345 = vunpack.c.l.b16 %v258
        %v346 = vunpack.c.l.b16 %v259
        %v347 = vunpack.c.l.b16 %v260
        %v348 = vunpack.c.l.b16 %v261
        %v349 = vunpack.c.l.b16 %v262
        %v350 = vunpack.c.l.b16 %v263
        %v351 = vunpack.c.l.b16 %v264
        %v352 = vunpack.c.l.b16 %v265
        %v353 = vunpack.c.l.b16 %v266
        %v354 = vunpack.c.l.b16 %v267
        %v355 = vunpack.c.l.b16 %v268
        %v356 = vunpack.c.l.b16 %v269
        %v357 = vunpack.c.l.b16 %v270
        %v358 = vunpack.c.l.b16 %v271
        %v359 = vunpack.c.l.b16 %v272
        %v360 = vunpack.c.l.b16 %v273
        %v361 = vunpack.c.l.b16 %v274
        %v362 = vunpack.c.l.b16 %v275
        %v363 = vunpack.c.l.b16 %v276
        %v364 = vunpack.c.l.b16 %v277
        %v365 = vunpack.c.l.b16 %v278
        %v366 = vunpack.c.l.b16 %v279
        %v367 = vunpack.c.l.b16 %v280
        %v368 = vunpack.c.l.b16 %v281
        %v369 = vpack.c.b16 %v338, %v337
        %v370 = vpack.c.b16 %v340, %v339
        %v371 = vpack.c.b16 %v342, %v341
        %v372 = vpack.c.b16 %v344, %v343
        %v373 = vpack.c.b16 %v346, %v345
        %v374 = vpack.c.b16 %v348, %v347
        %v375 = vpack.c.b16 %v350, %v349
        %v376 = vpack.c.b16 %v352, %v351
        %v377 = vpack.c.b16 %v354, %v353
        %v378 = vpack.c.b16 %v356, %v355
        %v379 = vpack.c.b16 %v358, %v357
        %v380 = vpack.c.b16 %v360, %v359
        %v381 = vpack.c.b16 %v362, %v361
        %v382 = vpack.c.b16 %v364, %v363
        %v383 = vpack.c.b16 %v366, %v365
        %v384 = vpack.c.b16 %v368, %v367
        %v417 = vunpack.c.l.b16 %v282
        %v418 = vunpack.c.l.b16 %v283
        %v419 = vunpack.c.l.b16 %v284
        %v420 = vunpack.c.l.b16 %v285
        %v421 = vunpack.c.l.b16 %v286
        %v422 = vunpack.c.l.b16 %v287
        %v423 = vunpack.c.l.b16 %v288
        %v424 = vunpack.c.l.b16 %v289
        %v425 = vunpack.c.l.b16 %v290
        %v426 = vunpack.c.l.b16 %v291
        %v427 = vunpack.c.l.b16 %v292
        %v428 = vunpack.c.l.b16 %v293
        %v429 = vunpack.c.l.b16 %v294
        %v430 = vunpack.c.l.b16 %v295
        %v431 = vunpack.c.l.b16 %v296
        %v432 = vunpack.c.l.b16 %v297
        %v433 = vpack.c.b16 %v418, %v417
        %v434 = vpack.c.b16 %v420, %v419
        %v435 = vpack.c.b16 %v422, %v421
        %v436 = vpack.c.b16 %v424, %v423
        %v437 = vpack.c.b16 %v426, %v425
        %v438 = vpack.c.b16 %v428, %v427
        %v439 = vpack.c.b16 %v430, %v429
        %v440 = vpack.c.b16 %v432, %v431
        %449 = vmatprep.subr.bf16.mxu0 0
        %450 = vmatpush1.bf16.msra.mxu0 %v440
        %451 = vmatprep.subr.bf16.mxu0 0
        %452 = vmatpush1.bf16.msra.mxu0 %v439
        %453 = vmatprep.subr.bf16.mxu0 0
        %454 = vmatpush1.bf16.msra.mxu0 %v438
        %455 = vmatprep.subr.bf16.mxu0 0
        %456 = vmatpush1.bf16.msra.mxu0 %v437
        %457 = vmatprep.subr.bf16.mxu0 0
        %458 = vmatpush1.bf16.msra.mxu0 %v436
        %459 = vmatprep.subr.bf16.mxu0 0
        %460 = vmatpush1.bf16.msra.mxu0 %v435
        %461 = vmatprep.subr.bf16.mxu0 0
        %462 = vmatpush1.bf16.msra.mxu0 %v434
        %463 = vmatprep.subr.bf16.mxu0 0
        %464 = vmatpush1.bf16.msra.mxu0 %v433
        %465 = vmatprep.subr.bf16.mxu0 0
        %466 = vmatpush2.bf16.msra.mxu0 0
        %467 = vmatprep.subr.bf16.mxu0 0
        %468 = vmatpush2.bf16.msra.mxu0 0
        %469 = vmatprep.subr.bf16.mxu0 0
        %470 = vmatpush2.bf16.msra.mxu0 0
        %471 = vmatprep.subr.bf16.mxu0 0
        %472 = vmatpush2.bf16.msra.mxu0 0
        %473 = vmatprep.subr.bf16.mxu0 0
        %474 = vmatpush2.bf16.msra.mxu0 0
        %475 = vmatprep.subr.bf16.mxu0 0
        %476 = vmatpush2.bf16.msra.mxu0 0
        %477 = vmatprep.subr.bf16.mxu0 0
        %478 = vmatpush2.bf16.msra.mxu0 0
        %479 = vmatprep.subr.bf16.mxu0 0
        %480 = vmatpush2.bf16.msra.mxu0 0
        %481 = vmatprep.mubr.bf16.mxu0 0
        %482 = vmatmul.mubr.bf16.gmra.mxu0 %v369
        %v483 = vpop.f32.mrf.mxu0
        %v484 = vadd.f32 %v303, %v483
        %v485 = vpop.f32.mrf.mxu0
        %v486 = vpop.f32.mrf.mxu0
        %v487 = vadd.f32 %v303, %v486
        %v488 = vpop.f32.mrf.mxu0
        %489 = vmatprep.mubr.bf16.mxu0 0
        %490 = vmatmul.mubr.bf16.gmra.mxu0 %v370
        %v491 = vpop.f32.mrf.mxu0
        %v492 = vadd.f32 %v303, %v491
        %v493 = vpop.f32.mrf.mxu0
        %v494 = vpop.f32.mrf.mxu0
        %v495 = vadd.f32 %v303, %v494
        %v496 = vpop.f32.mrf.mxu0
        %497 = vmatprep.mubr.bf16.mxu0 0
        %498 = vmatmul.mubr.bf16.gmra.mxu0 %v371
        %v499 = vpop.f32.mrf.mxu0
        %v500 = vadd.f32 %v303, %v499
        %v501 = vpop.f32.mrf.mxu0
        %v502 = vpop.f32.mrf.mxu0
        %v503 = vadd.f32 %v303, %v502
        %v504 = vpop.f32.mrf.mxu0
        %505 = vmatprep.mubr.bf16.mxu0 0
        %506 = vmatmul.mubr.bf16.gmra.mxu0 %v372
        %v507 = vpop.f32.mrf.mxu0
        %v508 = vadd.f32 %v303, %v507
        %v509 = vpop.f32.mrf.mxu0
        %v510 = vpop.f32.mrf.mxu0
        %v511 = vadd.f32 %v303, %v510
        %v512 = vpop.f32.mrf.mxu0
        %513 = vmatprep.mubr.bf16.mxu0 0
        %514 = vmatmul.mubr.bf16.gmra.mxu0 %v373
        %v515 = vpop.f32.mrf.mxu0
        %v516 = vadd.f32 %v303, %v515
        %v517 = vpop.f32.mrf.mxu0
        %v518 = vpop.f32.mrf.mxu0
        %v519 = vadd.f32 %v303, %v518
        %v520 = vpop.f32.mrf.mxu0
        %521 = vmatprep.mubr.bf16.mxu0 0
        %522 = vmatmul.mubr.bf16.gmra.mxu0 %v374
        %v523 = vpop.f32.mrf.mxu0
        %v524 = vadd.f32 %v303, %v523
        %v525 = vpop.f32.mrf.mxu0
        %v526 = vpop.f32.mrf.mxu0
        %v527 = vadd.f32 %v303, %v526
        %v528 = vpop.f32.mrf.mxu0
        %529 = vmatprep.mubr.bf16.mxu0 0
        %530 = vmatmul.mubr.bf16.gmra.mxu0 %v375
        %v531 = vpop.f32.mrf.mxu0
        %v532 = vadd.f32 %v303, %v531
        %v533 = vpop.f32.mrf.mxu0
        %v534 = vpop.f32.mrf.mxu0
        %v535 = vadd.f32 %v303, %v534
        %v536 = vpop.f32.mrf.mxu0
        %537 = vmatprep.mubr.bf16.mxu0 0
        %538 = vmatmul.mubr.bf16.gmra.mxu0 %v376
        %v539 = vpop.f32.mrf.mxu0
        %v540 = vadd.f32 %v303, %v539
        %v541 = vpop.f32.mrf.mxu0
        %v542 = vpop.f32.mrf.mxu0
        %v543 = vadd.f32 %v303, %v542
        %v544 = vpop.f32.mrf.mxu0
        %545 = vmatprep.mubr.bf16.mxu0 0
        %546 = vmatmul.mubr.bf16.gmra.mxu0 %v377
        %v547 = vpop.f32.mrf.mxu0
        %v548 = vadd.f32 %v303, %v547
        %v549 = vpop.f32.mrf.mxu0
        %v550 = vpop.f32.mrf.mxu0
        %v551 = vadd.f32 %v303, %v550
        %v552 = vpop.f32.mrf.mxu0
        %553 = vmatprep.mubr.bf16.mxu0 0
        %554 = vmatmul.mubr.bf16.gmra.mxu0 %v378
        %v555 = vpop.f32.mrf.mxu0
        %v556 = vadd.f32 %v303, %v555
        %v557 = vpop.f32.mrf.mxu0
        %v558 = vpop.f32.mrf.mxu0
        %v559 = vadd.f32 %v303, %v558
        %v560 = vpop.f32.mrf.mxu0
        %561 = vmatprep.mubr.bf16.mxu0 0
        %562 = vmatmul.mubr.bf16.gmra.mxu0 %v379
        %v563 = vpop.f32.mrf.mxu0
        %v564 = vadd.f32 %v303, %v563
        %v565 = vpop.f32.mrf.mxu0
        %v566 = vpop.f32.mrf.mxu0
        %v567 = vadd.f32 %v303, %v566
        %v568 = vpop.f32.mrf.mxu0
        %569 = vmatprep.mubr.bf16.mxu0 0
        %570 = vmatmul.mubr.bf16.gmra.mxu0 %v380
        %v571 = vpop.f32.mrf.mxu0
        %v572 = vadd.f32 %v303, %v571
        %v573 = vpop.f32.mrf.mxu0
        %v574 = vpop.f32.mrf.mxu0
        %v575 = vadd.f32 %v303, %v574
        %v576 = vpop.f32.mrf.mxu0
        %577 = vmatprep.mubr.bf16.mxu0 0
        %578 = vmatmul.mubr.bf16.gmra.mxu0 %v381
        %v579 = vpop.f32.mrf.mxu0
        %v580 = vadd.f32 %v303, %v579
        %v581 = vpop.f32.mrf.mxu0
        %v582 = vpop.f32.mrf.mxu0
        %v583 = vadd.f32 %v303, %v582
        %v584 = vpop.f32.mrf.mxu0
        %585 = vmatprep.mubr.bf16.mxu0 0
        %586 = vmatmul.mubr.bf16.gmra.mxu0 %v382
        %v587 = vpop.f32.mrf.mxu0
        %v588 = vadd.f32 %v303, %v587
        %v589 = vpop.f32.mrf.mxu0
        %v590 = vpop.f32.mrf.mxu0
        %v591 = vadd.f32 %v303, %v590
        %v592 = vpop.f32.mrf.mxu0
        %593 = vmatprep.mubr.bf16.mxu0 0
        %594 = vmatmul.mubr.bf16.gmra.mxu0 %v383
        %v595 = vpop.f32.mrf.mxu0
        %v596 = vadd.f32 %v303, %v595
        %v597 = vpop.f32.mrf.mxu0
        %v598 = vpop.f32.mrf.mxu0
        %v599 = vadd.f32 %v303, %v598
        %v600 = vpop.f32.mrf.mxu0
        %601 = vmatprep.mubr.bf16.mxu0 0
        %602 = vmatmul.mubr.bf16.gmra.mxu0 %v384
        %v603 = vpop.f32.mrf.mxu0
        %v604 = vadd.f32 %v303, %v603
        %v605 = vpop.f32.mrf.mxu0
        %v606 = vpop.f32.mrf.mxu0
        %v607 = vadd.f32 %v303, %v606
        %v608 = vpop.f32.mrf.mxu0
        %609 = vdwg.mxu0
        %v610 = vmax.f32 %v484, 0.0
        %v611 = vmax.f32 %v487, 0.0
        %v612 = vmax.f32 %v492, 0.0
        %v613 = vmax.f32 %v495, 0.0
        %v614 = vmax.f32 %v500, 0.0
        %v615 = vmax.f32 %v503, 0.0
        %v616 = vmax.f32 %v508, 0.0
        %v617 = vmax.f32 %v511, 0.0
        %v618 = vmax.f32 %v516, 0.0
        %v619 = vmax.f32 %v519, 0.0
        %v620 = vmax.f32 %v524, 0.0
        %v621 = vmax.f32 %v527, 0.0
        %v622 = vmax.f32 %v532, 0.0
        %v623 = vmax.f32 %v535, 0.0
        %v624 = vmax.f32 %v540, 0.0
        %v625 = vmax.f32 %v543, 0.0
        %v626 = vmax.f32 %v548, 0.0
        %v627 = vmax.f32 %v551, 0.0
        %v628 = vmax.f32 %v556, 0.0
        %v629 = vmax.f32 %v559, 0.0
        %v630 = vmax.f32 %v564, 0.0
        %v631 = vmax.f32 %v567, 0.0
        %v632 = vmax.f32 %v572, 0.0
        %v633 = vmax.f32 %v575, 0.0
        %v634 = vmax.f32 %v580, 0.0
        %v635 = vmax.f32 %v583, 0.0
        %v636 = vmax.f32 %v588, 0.0
        %v637 = vmax.f32 %v591, 0.0
        %v638 = vmax.f32 %v596, 0.0
        %v639 = vmax.f32 %v599, 0.0
        %v640 = vmax.f32 %v604, 0.0
        %v641 = vmax.f32 %v607, 0.0
        %v642 = vld [vmem:[%s3] sm:$0xff]
        %v643 = vld [vmem:[%s3 + $0x8] sm:$0xff]
        %v644 = vld [vmem:[%s3 + $0x10] sm:$0xff]
        %v645 = vld [vmem:[%s3 + $0x18] sm:$0xff]
        %v646 = vld [vmem:[%s3 + $0x20] sm:$0xff]
        %v647 = vld [vmem:[%s3 + $0x28] sm:$0xff]
        %v648 = vld [vmem:[%s3 + $0x30] sm:$0xff]
        %v649 = vld [vmem:[%s3 + $0x38] sm:$0xff]
        %v650 = vpack.c.bf16 %v611, %v610
        %v651 = vpack.c.bf16 %v613, %v612
        %v652 = vpack.c.bf16 %v615, %v614
        %v653 = vpack.c.bf16 %v617, %v616
        %v654 = vpack.c.bf16 %v619, %v618
        %v655 = vpack.c.bf16 %v621, %v620
        %v656 = vpack.c.bf16 %v623, %v622
        %v657 = vpack.c.bf16 %v625, %v624
        %v658 = vpack.c.bf16 %v627, %v626
        %v659 = vpack.c.bf16 %v629, %v628
        %v660 = vpack.c.bf16 %v631, %v630
        %v661 = vpack.c.bf16 %v633, %v632
        %v662 = vpack.c.bf16 %v635, %v634
        %v663 = vpack.c.bf16 %v637, %v636
        %v664 = vpack.c.bf16 %v639, %v638
        %v665 = vpack.c.bf16 %v641, %v640
        %v674 = vunpack.c.l.b16 %v642
        %v675 = vunpack.c.h.b16 %v642
        %v676 = vunpack.c.l.b16 %v643
        %v677 = vunpack.c.h.b16 %v643
        %v678 = vunpack.c.l.b16 %v644
        %v679 = vunpack.c.h.b16 %v644
        %v680 = vunpack.c.l.b16 %v645
        %v681 = vunpack.c.h.b16 %v645
        %v682 = vunpack.c.l.b16 %v646
        %v683 = vunpack.c.h.b16 %v646
        %v684 = vunpack.c.l.b16 %v647
        %v685 = vunpack.c.h.b16 %v647
        %v686 = vunpack.c.l.b16 %v648
        %v687 = vunpack.c.h.b16 %v648
        %v688 = vunpack.c.l.b16 %v649
        %v689 = vunpack.c.h.b16 %v649
        %v690 = vpack.c.b16 %v676, %v674
        %v691 = vpack.c.b16 %v677, %v675
        %v692 = vpack.c.b16 %v680, %v678
        %v693 = vpack.c.b16 %v681, %v679
        %v694 = vpack.c.b16 %v684, %v682
        %v695 = vpack.c.b16 %v685, %v683
        %v696 = vpack.c.b16 %v688, %v686
        %v697 = vpack.c.b16 %v689, %v687
        %706 = vmatprep.subr.bf16.mxu0 0
        %707 = vmatpush1.bf16.msra.mxu0 %v657
        %708 = vmatprep.subr.bf16.mxu0 0
        %709 = vmatpush1.bf16.msra.mxu0 %v656
        %710 = vmatprep.subr.bf16.mxu0 0
        %711 = vmatpush1.bf16.msra.mxu0 %v655
        %712 = vmatprep.subr.bf16.mxu0 0
        %713 = vmatpush1.bf16.msra.mxu0 %v654
        %714 = vmatprep.subr.bf16.mxu0 0
        %715 = vmatpush1.bf16.msra.mxu0 %v653
        %716 = vmatprep.subr.bf16.mxu0 0
        %717 = vmatpush1.bf16.msra.mxu0 %v652
        %718 = vmatprep.subr.bf16.mxu0 0
        %719 = vmatpush1.bf16.msra.mxu0 %v651
        %720 = vmatprep.subr.bf16.mxu0 0
        %721 = vmatpush1.bf16.msra.mxu0 %v650
        %722 = vmatprep.subr.bf16.mxu0 0
        %723 = vmatpush2.bf16.msra.mxu0 %v665
        %724 = vmatprep.subr.bf16.mxu0 0
        %725 = vmatpush2.bf16.msra.mxu0 %v664
        %726 = vmatprep.subr.bf16.mxu0 0
        %727 = vmatpush2.bf16.msra.mxu0 %v663
        %728 = vmatprep.subr.bf16.mxu0 0
        %729 = vmatpush2.bf16.msra.mxu0 %v662
        %730 = vmatprep.subr.bf16.mxu0 0
        %731 = vmatpush2.bf16.msra.mxu0 %v661
        %732 = vmatprep.subr.bf16.mxu0 0
        %733 = vmatpush2.bf16.msra.mxu0 %v660
        %734 = vmatprep.subr.bf16.mxu0 0
        %735 = vmatpush2.bf16.msra.mxu0 %v659
        %736 = vmatprep.subr.bf16.mxu0 0
        %737 = vmatpush2.bf16.msra.mxu0 %v658
        %738 = vmatprep.mubr.bf16.mxu0 %v691
        %739 = vmatmul.mubr.bf16.gmra.mxu0 %v690
        %v740 = vpop.f32.mrf.mxu0
        %v741 = vadd.f32 0.0, %v740
        %v742 = vpop.f32.mrf.mxu0
        %v743 = vpop.f32.mrf.mxu0
        %v744 = vadd.f32 0.0, %v743
        %v745 = vpop.f32.mrf.mxu0
        %746 = vmatprep.mubr.bf16.mxu0 %v693
        %747 = vmatmul.mubr.bf16.gmra.mxu0 %v692
        %v748 = vpop.f32.mrf.mxu0
        %v749 = vadd.f32 0.0, %v748
        %v750 = vpop.f32.mrf.mxu0
        %v751 = vpop.f32.mrf.mxu0
        %v752 = vadd.f32 0.0, %v751
        %v753 = vpop.f32.mrf.mxu0
        %754 = vmatprep.mubr.bf16.mxu0 %v695
        %755 = vmatmul.mubr.bf16.gmra.mxu0 %v694
        %v756 = vpop.f32.mrf.mxu0
        %v757 = vadd.f32 0.0, %v756
        %v758 = vpop.f32.mrf.mxu0
        %v759 = vpop.f32.mrf.mxu0
        %v760 = vadd.f32 0.0, %v759
        %v761 = vpop.f32.mrf.mxu0
        %762 = vmatprep.mubr.bf16.mxu0 %v697
        %763 = vmatmul.mubr.bf16.gmra.mxu0 %v696
        %v764 = vpop.f32.mrf.mxu0
        %v765 = vadd.f32 0.0, %v764
        %v766 = vpop.f32.mrf.mxu0
        %v767 = vpop.f32.mrf.mxu0
        %v768 = vadd.f32 0.0, %v767
        %v769 = vpop.f32.mrf.mxu0
        %770 = vdwg.mxu0
        %v771 = vpack.c.bf16 %v744, %v741
        %v772 = vpack.c.bf16 %v752, %v749
        %v773 = vpack.c.bf16 %v760, %v757
        %v774 = vpack.c.bf16 %v768, %v765
        %v775 = vld [vmem:[%s4] sm:$0xff]
        %v776 = vld [vmem:[%s4 + $0x8] sm:$0xff]
        %v777 = vld [vmem:[%s4 + $0x10] sm:$0xff]
        %v778 = vld [vmem:[%s4 + $0x18] sm:$0xff]
        %v779 = vld [vmem:[%s5] sm:$0x3]
        %v781 = vlaneseq
        %v782 = vshrl.u32 %v781, 7
        %v783 = vsub.s32 0, %v782
        %v784 = vrot.slane %v779, %v783
        %v785 = vlaneseq
        %v786 = vshrl.u32 %v785, 7
        %v787 = vsub.s32 1, %v786
        %v788 = vrot.slane %v779, %v787
        %v795 = vunpack.c.l.b16 %v775
        %v796 = vunpack.c.h.b16 %v775
        %v797 = vunpack.c.l.b16 %v776
        %v798 = vunpack.c.h.b16 %v776
        %v799 = vunpack.c.l.b16 %v777
        %v800 = vunpack.c.h.b16 %v777
        %v801 = vunpack.c.l.b16 %v778
        %v802 = vunpack.c.h.b16 %v778
        %v803 = vpack.c.b16 %v797, %v795
        %v804 = vpack.c.b16 %v798, %v796
        %v805 = vpack.c.b16 %v801, %v799
        %v806 = vpack.c.b16 %v802, %v800
        %vm811 = vcmask 261120
        %v813 = vsel %vm811, %v771, 0
        %v816 = vsel %vm811, %v772, 0
        %v819 = vsel %vm811, %v773, 0
        %v822 = vsel %vm811, %v774, 0
        %824 = vmatprep.subr.bf16.mxu0 0
        %825 = vmatpush1.bf16.msra.mxu0 0
        %826 = vmatprep.subr.bf16.mxu0 0
        %827 = vmatpush1.bf16.msra.mxu0 0
        %828 = vmatprep.subr.bf16.mxu0 0
        %829 = vmatpush1.bf16.msra.mxu0 0
        %830 = vmatprep.subr.bf16.mxu0 0
        %831 = vmatpush1.bf16.msra.mxu0 0
        %832 = vmatprep.subr.bf16.mxu0 0
        %833 = vmatpush1.bf16.msra.mxu0 0
        %834 = vmatprep.subr.bf16.mxu0 0
        %835 = vmatpush1.bf16.msra.mxu0 0
        %836 = vmatprep.subr.bf16.mxu0 %v806
        %837 = vmatpush1.bf16.msra.mxu0 %v805
        %838 = vmatprep.subr.bf16.mxu0 %v804
        %839 = vmatpush1.bf16.msra.mxu0 %v803
        %840 = vmatprep.subr.bf16.mxu0 0
        %841 = vmatpush2.bf16.msra.mxu0 0
        %842 = vmatprep.subr.bf16.mxu0 0
        %843 = vmatpush2.bf16.msra.mxu0 0
        %844 = vmatprep.subr.bf16.mxu0 0
        %845 = vmatpush2.bf16.msra.mxu0 0
        %846 = vmatprep.subr.bf16.mxu0 0
        %847 = vmatpush2.bf16.msra.mxu0 0
        %848 = vmatprep.subr.bf16.mxu0 0
        %849 = vmatpush2.bf16.msra.mxu0 0
        %850 = vmatprep.subr.bf16.mxu0 0
        %851 = vmatpush2.bf16.msra.mxu0 0
        %852 = vmatprep.subr.bf16.mxu0 0
        %853 = vmatpush2.bf16.msra.mxu0 0
        %854 = vmatprep.subr.bf16.mxu0 0
        %855 = vmatpush2.bf16.msra.mxu0 0
        %856 = vmatprep.mubr.bf16.mxu0 0
        %857 = vmatmul.mubr.bf16.gmra.mxu0 %v813
        %v858 = vpop.f32.mrf.mxu0
        %v859 = vadd.f32 %v784, %v858
        %v860 = vpop.f32.mrf.mxu0
        %v861 = vadd.f32 %v788, %v860
        %v862 = vpop.f32.mrf.mxu0
        %v863 = vadd.f32 %v784, %v862
        %v864 = vpop.f32.mrf.mxu0
        %v865 = vadd.f32 %v788, %v864
        %866 = vmatprep.mubr.bf16.mxu0 0
        %867 = vmatmul.mubr.bf16.gmra.mxu0 %v816
        %v868 = vpop.f32.mrf.mxu0
        %v869 = vadd.f32 %v784, %v868
        %v870 = vpop.f32.mrf.mxu0
        %v871 = vadd.f32 %v788, %v870
        %v872 = vpop.f32.mrf.mxu0
        %v873 = vadd.f32 %v784, %v872
        %v874 = vpop.f32.mrf.mxu0
        %v875 = vadd.f32 %v788, %v874
        %876 = vmatprep.mubr.bf16.mxu0 0
        %877 = vmatmul.mubr.bf16.gmra.mxu0 %v819
        %v878 = vpop.f32.mrf.mxu0
        %v879 = vadd.f32 %v784, %v878
        %v880 = vpop.f32.mrf.mxu0
        %v881 = vadd.f32 %v788, %v880
        %v882 = vpop.f32.mrf.mxu0
        %v883 = vadd.f32 %v784, %v882
        %v884 = vpop.f32.mrf.mxu0
        %v885 = vadd.f32 %v788, %v884
        %886 = vmatprep.mubr.bf16.mxu0 0
        %887 = vmatmul.mubr.bf16.gmra.mxu0 %v822
        %v888 = vpop.f32.mrf.mxu0
        %v889 = vadd.f32 %v784, %v888
        %v890 = vpop.f32.mrf.mxu0
        %v891 = vadd.f32 %v788, %v890
        %v892 = vpop.f32.mrf.mxu0
        %v893 = vadd.f32 %v784, %v892
        %v894 = vpop.f32.mrf.mxu0
        %v895 = vadd.f32 %v788, %v894
        %896 = vdwg.mxu0
        %v897 = vmax.f32 %v861, %v881
        %v898 = vmax.f32 %v865, %v885
        %v899 = vmax.f32 %v871, %v891
        %v900 = vmax.f32 %v875, %v895
        %v901 = vmax.f32 %v897, %v898
        %v902 = vmax.f32 %v899, %v900
        %v903 = vmax.f32 %v901, %v902
        %v904 = vrot.slane %v903, 4
        %v905 = vmax.f32 %v903, %v904
        %v906 = vrot.slane %v905, 2
        %v907 = vmax.f32 %v905, %v906
        %v908 = vrot.slane %v907, 1
        %v909 = vmax.f32 %v907, %v908
        %v910 = vsub.f32 %v861, %v909
        %v911 = vsub.f32 %v865, %v909
        %v912 = vsub.f32 %v871, %v909
        %v913 = vsub.f32 %v875, %v909
        %v914 = vsub.f32 %v881, %v909
        %v915 = vsub.f32 %v885, %v909
        %v916 = vsub.f32 %v891, %v909
        %v917 = vsub.f32 %v895, %v909
        %v918 = vmul.f32 %v910, 1.442695
        %v919 = vpow.pop %v918
        %v920 = vmul.f32 %v911, 1.442695
        %v921 = vpow.pop %v920
        %v922 = vmul.f32 %v912, 1.442695
        %v923 = vpow.pop %v922
        %v924 = vmul.f32 %v913, 1.442695
        %v925 = vpow.pop %v924
        %v926 = vmul.f32 %v914, 1.442695
        %v927 = vpow.pop %v926
        %v928 = vmul.f32 %v915, 1.442695
        %v929 = vpow.pop %v928
        %v930 = vmul.f32 %v916, 1.442695
        %v931 = vpow.pop %v930
        %v932 = vmul.f32 %v917, 1.442695
        %v933 = vpow.pop %v932
        %v934 = vadd.f32 %v919, %v921
        %v935 = vadd.f32 %v934, %v923
        %v936 = vadd.f32 %v935, %v925
        %v937 = vadd.f32 %v936, %v927
        %v938 = vadd.f32 %v937, %v929
        %v939 = vadd.f32 %v938, %v931
        %v940 = vadd.f32 %v939, %v933
        %v941 = vrot.slane %v940, 4
        %v942 = vadd.f32 %v940, %v941
        %v943 = vrot.slane %v942, 2
        %v944 = vadd.f32 %v942, %v943
        %v945 = vrot.slane %v944, 1
        %v946 = vadd.f32 %v944, %v945
        %v947 = vrcp.pop %v946
        %v948 = vmul.f32 %v919, %v947
        %v949 = vmul.f32 %v921, %v947
        %v950 = vmul.f32 %v923, %v947
        %v951 = vmul.f32 %v925, %v947
        %v952 = vmul.f32 %v927, %v947
        %v953 = vmul.f32 %v929, %v947
        %v954 = vmul.f32 %v931, %v947
        %v955 = vmul.f32 %v933, %v947
        %v956 = vmul.f32 %v859, %v948
        %v957 = vmul.f32 %v863, %v949
        %v958 = vmul.f32 %v869, %v950
        %v959 = vmul.f32 %v873, %v951
        %v960 = vmul.f32 %v879, %v952
        %v961 = vmul.f32 %v883, %v953
        %v962 = vmul.f32 %v889, %v954
        %v963 = vmul.f32 %v893, %v955
        %v964 = vadd.f32 %v956, %v957
        %v965 = vadd.f32 %v964, %v958
        %v966 = vadd.f32 %v965, %v959
        %v967 = vadd.f32 %v966, %v960
        %v968 = vadd.f32 %v967, %v961
        %v969 = vadd.f32 %v968, %v962
        %v970 = vadd.f32 %v969, %v963
        %v971 = vrot.slane %v970, 4
        %v972 = vadd.f32 %v970, %v971
        %v973 = vrot.slane %v972, 2
        %v974 = vadd.f32 %v972, %v973
        %v975 = vrot.slane %v974, 1
        %v976 = vadd.f32 %v974, %v975
        %977 = vst [vmem:[%s243] sm:$0x1] %v976
        %s978 = sand.u32 %s159, 1
        %s979 = scalar_lea.sflag [#allocation3], %s978
        %s980 = sand.u32 %s159, 1
        %s981 = scalar_lea.vmem [#allocation2], %s980
        // Predicated region
        $region45: #{forward.1} parent=43 // pred_check
          %p982 = pneg %p169
        $region46: #{forward.1} parent=43 // pred_check_branch
          %984 = sbr.rel (%p982) target = $region48
        $region47: #{forward.1} parent=43 // pred_region
          %s986 = ssub.s32 16, 16
          %987 = vsyncadd %s979, %s986
          %s988 = smul.addr %s20, 16
          %s989 = scalar_lea.hbm %s6, %s988
          %s991 = sshll.u32 %s981, 4
          %s992 = int_to_ptr.vmem [resolvable:$true] %s991
          %994 = dma.vmem_to_hbm [thread:$0]  %s992, 16, %s989, %s979
        $region48: #{forward.1} parent=43 // pred_fallthru
          _
      $region44: #{forward.1} parent=5 // pred_fallthru
        _
      %p995 = scmp.le.s32.totalorder 2, %s15
      // Predicated region
      $region49: #{forward.1} parent=5 // pred_check
        %p996 = pneg %p995
      $region50: #{forward.1} parent=5 // pred_check_branch
        %998 = sbr.rel (%p996) target = $region52
      $region51: #{forward.1} parent=5 // pred_region
        %s999 = ssub.s32 %s15, 2
        // Predicated region
        $region53: #{forward.1} parent=51 // pred_check
          %p1000 = pneg %p175
        $region54: #{forward.1} parent=51 // pred_check_branch
          %1002 = sbr.rel (%p1000) target = $region56
        $region55: #{forward.1} parent=51 // pred_region
          %s1003 = sand.u32 %s160, 1
          %s1004 = scalar_lea.sflag [#allocation3], %s1003
          %s1005 = sand.u32 %s160, 1
          %s1006 = scalar_lea.vmem [#allocation2], %s1005
          %1007 = dma.done %s1004, 16
        $region56: #{forward.1} parent=51 // pred_fallthru
          _
      $region52: #{forward.1} parent=5 // pred_fallthru
        _
    $region6: #{forward.1} parent=1 // loop_footer
      %s19 = sadd.s32 1, %s15
    $region7: #{forward.1} parent=1 // loop_footer_branch
      %14 = sbr.rel target = $region3
    $region8: #{forward.1} parent=1 // loop_exit
      _
    %1008 = vsyncpa [#allocation3], 1
    %s1009 = scalar_lea.sflag [#allocation3], 1
    %1010 = vsyncpa %s1009, 1

</llo_original>
